<compile_context>
chip_gen: v7x
topology: tpu7x:2x2x1
jax: 0.10.0
libtpu: 0.0.40
codegen_flags: <defaults>
</compile_context>

<pallas_src>
import math

import jax
import jax.numpy as jnp
from jax import lax
from jax.experimental import pallas as pl
from jax.experimental.pallas import tpu as pltpu


def _cdiv(a, b):
    return -(-a // b)


def _round_up(x, m):
    return _cdiv(x, m) * m


def _num_tensorcores():
    """Best-effort TensorCores-per-chip count (2 on v7x, 1 on v5e/v6e)."""
    try:
        info = pltpu.get_tpu_info()
    except Exception:
        return 1
    for name in ("num_cores", "core_count", "num_tensorcores",
                 "tensorcore_count", "num_cores_per_chip", "cores_per_chip"):
        try:
            n = int(getattr(info, name))
        except (AttributeError, TypeError, ValueError):
            continue
        if n >= 1:
            return n
    return 1


# -----------------------------------------------------------------------------
# Fused kernel: both 4-layer MLPs; activations transposed (features x batch).
# -----------------------------------------------------------------------------
def _fused_kernel(x_ref,
                  s_w1, s_b1, s_w2, s_b2, s_w3, s_b3, s_wo, s_bo,
                  p_w1, p_w1s, p_b1, p_w2, p_b2, p_w3, p_b3, p_wo, p_bo,
                  out_ref):
    # x arrives in its natural (T, d_in) f32 layout.  The transpose into the
    # features-on-sublanes orientation is folded into the first-layer matmuls
    # (contract both minor dims == W @ x^T on the MXU): no wrapper-side
    # transpose/cast HBM round trip and no in-kernel relayout pass.
    xb = x_ref[...].astype(jnp.bfloat16)                        # (T, d_in) bf16

    def first_layer(w_ref, b_ref):
        # (out, d_in) contracted with (T, d_in) on the minor dims -> (out, T).
        h = lax.dot_general(w_ref[...], xb,
                            dimension_numbers=(((1,), (1,)), ((), ())),
                            preferred_element_type=jnp.float32)
        return h + b_ref[...]

    def dense_relu(w_ref, b_ref, act):
        h = jnp.dot(w_ref[...], act.astype(w_ref.dtype),
                    preferred_element_type=jnp.float32) + b_ref[...]
        return jnp.maximum(h, 0.0)

    # ---------------- suction model ----------------
    h = jnp.maximum(first_layer(s_w1, s_b1), 0.0)               # (64, T) f32
    h = dense_relu(s_w2, s_b2, h)                               # (64, T)
    h = dense_relu(s_w3, s_b3, h)                               # (32, T)
    # 32 -> 1 head: VPU multiply + cross-sublane (XLU) reduce; keeps the MXU
    # free and yields a lane-dense (1, T) slab directly.
    s1 = jnp.sum(h * s_wo[...], axis=0, keepdims=True) + s_bo[...]   # (1, T)
    out_ref[0:1, :] = s1.astype(out_ref.dtype)                  # direct row store

    # ---------------- paddle model ----------------
    # torch.column_stack((x[:, 2:8], score1)) folded into layer 1:
    #   p_w1  = x-weight zero-padded to (64, d_in) (only cols 2..7 nonzero),
    #   p_w1s = score column (64, 1) applied as a rank-1 VPU update.
    g = first_layer(p_w1, p_b1) + p_w1s[...] * s1               # (64, T)
    g = jnp.maximum(g, 0.0)
    g = dense_relu(p_w2, p_b2, g)                               # (64, T)
    g = dense_relu(p_w3, p_b3, g)                               # (32, T)
    s2 = jnp.sum(g * p_wo[...], axis=0, keepdims=True) + p_bo[...]   # (1, T)
    out_ref[1:2, :] = s2.astype(out_ref.dtype)


# -----------------------------------------------------------------------------
# Wrapper
# -----------------------------------------------------------------------------
def packing_score_predictor(x, params, *, tile_b=2048, core_parallel=None):
    """x: (B, d_in) float32 with d_in >= 8.

    params = (suction_layers, paddle_layers); each is a list of 4 tuples
    (W [out, in] f32 -- PyTorch Linear layout, b [out] f32).
    Returns [packing_score_1 (B, 1), packing_score_2 (B, 1)].
    """
    suction, paddle = params
    B, d_in = x.shape
    assert d_in >= 8, "the module reads x[:, 2:8]"
    assert suction[0][0].shape[1] == d_in
    assert paddle[0][0].shape[1] == 7, "paddle layer-1 expects 6 x-features + 1 score"
    assert suction[3][0].shape[0] == 1 and paddle[3][0].shape[0] == 1

    # Adaptive batch tile: as close as possible to tile_b (large tiles amortize
    # the per-grid-step overhead) while bounding padding waste to <128 rows.
    # VMEM stays tiny (biggest live intermediate is (64, T) f32), so the same
    # tile is safe on v5e/v6e (128 MiB) and v7x (64 MiB).
    tile_b = max(128, int(tile_b))
    n_hint = max(1, _cdiv(B, tile_b))
    tb = _round_up(_cdiv(B, n_hint), 128)
    bp = _round_up(B, tb)
    n_tiles = bp // tb

    # Only a tiny row pad when B isn't a multiple of 128; no transpose / cast
    # round trip through HBM (layout fold happens inside the kernel).
    xp = x.astype(jnp.float32)
    if bp != B:
        xp = jnp.pad(xp, ((0, bp - B), (0, 0)))

    def mm(w):   # matmul weight, PyTorch [out, in] layout -> bf16 MXU operand
        return w.astype(jnp.bfloat16)

    def col(b):  # bias as (out, 1) f32 column (broadcasts over lanes)
        return b.reshape(-1, 1).astype(jnp.float32)

    (sw1, sb1), (sw2, sb2), (sw3, sb3), (swo, sbo) = suction
    (pw1, pb1), (pw2, pb2), (pw3, pb3), (pwo, pbo) = paddle

    # Paddle layer-1 x-weight zero-padded to (out, d_in): columns 2..7 hold the
    # original 6 x-feature columns, everything else is 0, so the kernel feeds
    # it the full x operand (no sublane slice in-kernel).
    pw1x = jnp.zeros((pw1.shape[0], d_in), jnp.float32).at[:, 2:8].set(pw1[:, 0:6])

    args = (
        xp,
        mm(sw1), col(sb1), mm(sw2), col(sb2), mm(sw3), col(sb3),
        swo.T.astype(jnp.float32), col(sbo),                     # (32,1), (1,1)
        mm(pw1x), pw1[:, 6:7].astype(jnp.float32), col(pb1),
        mm(pw2), col(pb2), mm(pw3), col(pb3),
        pwo.T.astype(jnp.float32), col(pbo),                     # (32,1), (1,1)
    )

    def _resident(a):
        # Full-array block + constant block index: DMA'd once, stays VMEM-
        # resident across all grid iterations (total weights < 50 KiB).
        return pl.BlockSpec(a.shape, lambda i: (0, 0))

    in_specs = [pl.BlockSpec((tb, d_in), lambda i: (i, 0))] \
             + [_resident(a) for a in args[1:]]

    def build(dim_sem):
        return pl.pallas_call(
            _fused_kernel,
            out_shape=jax.ShapeDtypeStruct((2, bp), jnp.float32),
            grid_spec=pltpu.PrefetchScalarGridSpec(
                num_scalar_prefetch=0,
                grid=(n_tiles,),
                in_specs=in_specs,
                out_specs=pl.BlockSpec((2, tb), lambda i: (0, i)),
            ),
            compiler_params=pltpu.CompilerParams(dimension_semantics=dim_sem),
        )

    if core_parallel is None:
        core_parallel = (_num_tensorcores() >= 2) and (n_tiles >= 2)

    out = None
    if core_parallel:
        # v7x: actually shard the batch grid across both TensorCores.
        try:
            out = build((pltpu.CORE_PARALLEL,))(*args)
        except Exception:
            out = None      # backend rejected CORE_PARALLEL -> fall back below
    if out is None:
        out = build(("parallel",))(*args)

    # NOTE: padded batch rows carry garbage scores via the bias/ReLU path; they
    # are sliced off here and must never be read by downstream consumers.
    s1 = out[0, :B].reshape(B, 1)
    s2 = out[1, :B].reshape(B, 1)
    return [s1, s2]


# -----------------------------------------------------------------------------
# Deterministic init matching the PyTorch module (xavier_uniform_, bias=0.01).
# -----------------------------------------------------------------------------
def _xavier_uniform(key, fan_out, fan_in):
    a = math.sqrt(6.0 / (fan_in + fan_out))
    return jax.random.uniform(key, (fan_out, fan_in), jnp.float32, -a, a)


def _init_mlp(key, layer_dict):
    params = []
    for name in ('1', '2', '3', 'output'):
        d_in, d_out = layer_dict[name]
        key, sub = jax.random.split(key)
        w = _xavier_uniform(sub, d_out, d_in)          # PyTorch [out, in]
        b = jnp.full((d_out,), 0.01, jnp.float32)      # bias.data.fill_(0.01)
        params.append((w, b))
    return key, params


def init_params(key, model_dict):
    key, suction = _init_mlp(key, model_dict['suction_dict'])
    key, paddle = _init_mlp(key, model_dict['paddle_dict'])
    return (suction, paddle)


# Pure-JAX (f32) reference mirroring the PyTorch forward.
def _mlp_ref(v, layers):
    for i, (w, b) in enumerate(layers):
        v = v @ w.T + b
        if i < len(layers) - 1:
            v = jnp.maximum(v, 0.0)
    return v


def reference_forward(x, params):
    suction, paddle = params
    s1 = _mlp_ref(x, suction)
    xp = jnp.concatenate([x[:, 2:8], s1], axis=1)      # torch.column_stack
    s2 = _mlp_ref(xp, paddle)
    return [s1, s2]


if __name__ == "__main__":
    model_dict = {
        'suction_dict': {'1': (8, 64), '2': (64, 64), '3': (64, 32), 'output': (32, 1)},
        'paddle_dict':  {'1': (7, 64), '2': (64, 64), '3': (64, 32), 'output': (32, 1)},
    }
    batch = 8

    key = jax.random.PRNGKey(0)
    key, xkey = jax.random.split(key)
    x = jax.random.normal(xkey, (batch, model_dict['suction_dict']['1'][0]), jnp.float32)

    params = init_params(key, model_dict)

    s1, s2 = packing_score_predictor(x, params)
    s1, s2 = jax.block_until_ready((s1, s2))

    r1, r2 = reference_forward(x, params)
    assert s1.shape == (batch, 1) and s2.shape == (batch, 1)
    # bf16 MXU operands vs f32 reference -> loose tolerance (error does not
    # compound: s1 feeding the paddle model is kept in f32).
    assert jnp.allclose(s1, r1, atol=5e-2, rtol=5e-2), "score1 mismatch vs reference"
    assert jnp.allclose(s2, r2, atol=5e-2, rtol=5e-2), "score2 mismatch vs reference"

    print("KERNEL_OK")
</pallas_src>

<mosaic_0001>
module attributes {stable_mosaic.version = 11 : i64} {
  func.func @_fused_kernel(%arg0: i32, %arg1: memref<128x8xf32, #tpu.memory_space<vmem>>, %arg2: memref<64x8xbf16, #tpu.memory_space<vmem>>, %arg3: memref<64x1xf32, #tpu.memory_space<vmem>>, %arg4: memref<64x64xbf16, #tpu.memory_space<vmem>>, %arg5: memref<64x1xf32, #tpu.memory_space<vmem>>, %arg6: memref<32x64xbf16, #tpu.memory_space<vmem>>, %arg7: memref<32x1xf32, #tpu.memory_space<vmem>>, %arg8: memref<32x1xf32, #tpu.memory_space<vmem>>, %arg9: memref<1x1xf32, #tpu.memory_space<vmem>>, %arg10: memref<64x8xbf16, #tpu.memory_space<vmem>>, %arg11: memref<64x1xf32, #tpu.memory_space<vmem>>, %arg12: memref<64x1xf32, #tpu.memory_space<vmem>>, %arg13: memref<64x64xbf16, #tpu.memory_space<vmem>>, %arg14: memref<64x1xf32, #tpu.memory_space<vmem>>, %arg15: memref<32x64xbf16, #tpu.memory_space<vmem>>, %arg16: memref<32x1xf32, #tpu.memory_space<vmem>>, %arg17: memref<32x1xf32, #tpu.memory_space<vmem>>, %arg18: memref<1x1xf32, #tpu.memory_space<vmem>>, %arg19: memref<2x128xf32, #tpu.memory_space<vmem>>) attributes {dimension_semantics = [#tpu.dimension_semantics<parallel>], iteration_bounds = array<i64: 1>, scalar_prefetch = 0 : i64, scratch_operands = 0 : i64, tpu.core_type = #tpu.core_type<tc>, window_params = [{transform_indices = @transform_0, window_bounds = array<i64: 128, 8>}, {pipeline_mode = #tpu.pipeline_mode<synchronous>, transform_indices = @transform_1, window_bounds = array<i64: 64, 8>}, {pipeline_mode = #tpu.pipeline_mode<synchronous>, transform_indices = @transform_2, window_bounds = array<i64: 64, 1>}, {pipeline_mode = #tpu.pipeline_mode<synchronous>, transform_indices = @transform_3, window_bounds = array<i64: 64, 64>}, {pipeline_mode = #tpu.pipeline_mode<synchronous>, transform_indices = @transform_4, window_bounds = array<i64: 64, 1>}, {pipeline_mode = #tpu.pipeline_mode<synchronous>, transform_indices = @transform_5, window_bounds = array<i64: 32, 64>}, {pipeline_mode = #tpu.pipeline_mode<synchronous>, transform_indices = @transform_6, window_bounds = array<i64: 32, 1>}, {pipeline_mode = #tpu.pipeline_mode<synchronous>, transform_indices = @transform_7, window_bounds = array<i64: 32, 1>}, {pipeline_mode = #tpu.pipeline_mode<synchronous>, transform_indices = @transform_8, window_bounds = array<i64: 1, 1>}, {pipeline_mode = #tpu.pipeline_mode<synchronous>, transform_indices = @transform_9, window_bounds = array<i64: 64, 8>}, {pipeline_mode = #tpu.pipeline_mode<synchronous>, transform_indices = @transform_10, window_bounds = array<i64: 64, 1>}, {pipeline_mode = #tpu.pipeline_mode<synchronous>, transform_indices = @transform_11, window_bounds = array<i64: 64, 1>}, {pipeline_mode = #tpu.pipeline_mode<synchronous>, transform_indices = @transform_12, window_bounds = array<i64: 64, 64>}, {pipeline_mode = #tpu.pipeline_mode<synchronous>, transform_indices = @transform_13, window_bounds = array<i64: 64, 1>}, {pipeline_mode = #tpu.pipeline_mode<synchronous>, transform_indices = @transform_14, window_bounds = array<i64: 32, 64>}, {pipeline_mode = #tpu.pipeline_mode<synchronous>, transform_indices = @transform_15, window_bounds = array<i64: 32, 1>}, {pipeline_mode = #tpu.pipeline_mode<synchronous>, transform_indices = @transform_16, window_bounds = array<i64: 32, 1>}, {pipeline_mode = #tpu.pipeline_mode<synchronous>, transform_indices = @transform_17, window_bounds = array<i64: 1, 1>}, {transform_indices = @transform_18, window_bounds = array<i64: 2, 128>}]} {
    %c0 = arith.constant 0 : index
    %c0_0 = arith.constant 0 : index
    %0 = vector.load %arg1[%c0, %c0_0] : memref<128x8xf32, #tpu.memory_space<vmem>>, vector<128x8xf32>
    %1 = arith.truncf %0 : vector<128x8xf32> to vector<128x8xbf16>
    %c0_1 = arith.constant 0 : index
    %c0_2 = arith.constant 0 : index
    %2 = vector.load %arg2[%c0_1, %c0_2] : memref<64x8xbf16, #tpu.memory_space<vmem>>, vector<64x8xbf16>
    %cst = arith.constant dense<0.000000e+00> : vector<64x128xf32>
    %3 = tpu.matmul %2, %1, %cst {dimension_numbers = #tpu.dot_dimension_numbers<[1], [1], [0], [0], [0, 0, 1, 0], [], []>} : vector<64x8xbf16>, vector<128x8xbf16>, vector<64x128xf32> -> vector<64x128xf32>
    %c0_3 = arith.constant 0 : index
    %c0_4 = arith.constant 0 : index
    %4 = vector.load %arg3[%c0_3, %c0_4] : memref<64x1xf32, #tpu.memory_space<vmem>>, vector<64x1xf32>
    %5 = vector.broadcast %4 : vector<64x1xf32> to vector<64x128xf32>
    %6 = arith.addf %3, %5 : vector<64x128xf32>
    %cst_5 = arith.constant 0.000000e+00 : f32
    %7 = vector.broadcast %cst_5 : f32 to vector<64x128xf32>
    %8 = arith.maximumf %6, %7 : vector<64x128xf32>
    %c0_6 = arith.constant 0 : index
    %c0_7 = arith.constant 0 : index
    %9 = vector.load %arg4[%c0_6, %c0_7] : memref<64x64xbf16, #tpu.memory_space<vmem>>, vector<64x64xbf16>
    %10 = arith.truncf %8 : vector<64x128xf32> to vector<64x128xbf16>
    %cst_8 = arith.constant dense<0.000000e+00> : vector<64x128xf32>
    %11 = tpu.matmul %9, %10, %cst_8 {dimension_numbers = #tpu.dot_dimension_numbers<[1], [0], [0], [1], [0, 0, 1, 1], [], []>} : vector<64x64xbf16>, vector<64x128xbf16>, vector<64x128xf32> -> vector<64x128xf32>
    %c0_9 = arith.constant 0 : index
    %c0_10 = arith.constant 0 : index
    %12 = vector.load %arg5[%c0_9, %c0_10] : memref<64x1xf32, #tpu.memory_space<vmem>>, vector<64x1xf32>
    %13 = vector.broadcast %12 : vector<64x1xf32> to vector<64x128xf32>
    %14 = arith.addf %11, %13 : vector<64x128xf32>
    %cst_11 = arith.constant 0.000000e+00 : f32
    %15 = vector.broadcast %cst_11 : f32 to vector<64x128xf32>
    %16 = arith.maximumf %14, %15 : vector<64x128xf32>
    %c0_12 = arith.constant 0 : index
    %c0_13 = arith.constant 0 : index
    %17 = vector.load %arg6[%c0_12, %c0_13] : memref<32x64xbf16, #tpu.memory_space<vmem>>, vector<32x64xbf16>
    %18 = arith.truncf %16 : vector<64x128xf32> to vector<64x128xbf16>
    %cst_14 = arith.constant dense<0.000000e+00> : vector<32x128xf32>
    %19 = tpu.matmul %17, %18, %cst_14 {dimension_numbers = #tpu.dot_dimension_numbers<[1], [0], [0], [1], [0, 0, 1, 1], [], []>} : vector<32x64xbf16>, vector<64x128xbf16>, vector<32x128xf32> -> vector<32x128xf32>
    %c0_15 = arith.constant 0 : index
    %c0_16 = arith.constant 0 : index
    %20 = vector.load %arg7[%c0_15, %c0_16] : memref<32x1xf32, #tpu.memory_space<vmem>>, vector<32x1xf32>
    %21 = vector.broadcast %20 : vector<32x1xf32> to vector<32x128xf32>
    %22 = arith.addf %19, %21 : vector<32x128xf32>
    %cst_17 = arith.constant 0.000000e+00 : f32
    %23 = vector.broadcast %cst_17 : f32 to vector<32x128xf32>
    %24 = arith.maximumf %22, %23 : vector<32x128xf32>
    %c0_18 = arith.constant 0 : index
    %c0_19 = arith.constant 0 : index
    %25 = vector.load %arg8[%c0_18, %c0_19] : memref<32x1xf32, #tpu.memory_space<vmem>>, vector<32x1xf32>
    %26 = vector.broadcast %25 : vector<32x1xf32> to vector<32x128xf32>
    %27 = arith.mulf %24, %26 : vector<32x128xf32>
    %cst_20 = arith.constant dense<0.000000e+00> : vector<128xf32>
    %28 = vector.multi_reduction <add>, %27, %cst_20 [0] : vector<32x128xf32> to vector<128xf32>
    %29 = vector.shape_cast %28 : vector<128xf32> to vector<1x128xf32>
    %c0_21 = arith.constant 0 : index
    %c0_22 = arith.constant 0 : index
    %30 = vector.load %arg9[%c0_21, %c0_22] : memref<1x1xf32, #tpu.memory_space<vmem>>, vector<1x1xf32>
    %31 = vector.broadcast %30 : vector<1x1xf32> to vector<1x128xf32>
    %32 = arith.addf %29, %31 : vector<1x128xf32>
    %c0_23 = arith.constant 0 : index
    %c0_24 = arith.constant 0 : index
    %33 = vector.load %arg19[%c0_23, %c0_24] : memref<2x128xf32, #tpu.memory_space<vmem>>, vector<1x128xf32>
    tpu.vector_store %arg19[%c0_23, %c0_24], %32 {strides = array<i32>} : memref<2x128xf32, #tpu.memory_space<vmem>>, vector<1x128xf32>,
    %c0_25 = arith.constant 0 : index
    %c0_26 = arith.constant 0 : index
    %34 = vector.load %arg10[%c0_25, %c0_26] : memref<64x8xbf16, #tpu.memory_space<vmem>>, vector<64x8xbf16>
    %cst_27 = arith.constant dense<0.000000e+00> : vector<64x128xf32>
    %35 = tpu.matmul %34, %1, %cst_27 {dimension_numbers = #tpu.dot_dimension_numbers<[1], [1], [0], [0], [0, 0, 1, 0], [], []>} : vector<64x8xbf16>, vector<128x8xbf16>, vector<64x128xf32> -> vector<64x128xf32>
    %c0_28 = arith.constant 0 : index
    %c0_29 = arith.constant 0 : index
    %36 = vector.load %arg12[%c0_28, %c0_29] : memref<64x1xf32, #tpu.memory_space<vmem>>, vector<64x1xf32>
    %37 = vector.broadcast %36 : vector<64x1xf32> to vector<64x128xf32>
    %38 = arith.addf %35, %37 : vector<64x128xf32>
    %c0_30 = arith.constant 0 : index
    %c0_31 = arith.constant 0 : index
    %39 = vector.load %arg11[%c0_30, %c0_31] : memref<64x1xf32, #tpu.memory_space<vmem>>, vector<64x1xf32>
    %40 = vector.broadcast %39 : vector<64x1xf32> to vector<64x128xf32>
    %41 = vector.broadcast %32 : vector<1x128xf32> to vector<64x128xf32>
    %42 = arith.mulf %40, %41 : vector<64x128xf32>
    %43 = arith.addf %38, %42 : vector<64x128xf32>
    %cst_32 = arith.constant 0.000000e+00 : f32
    %44 = vector.broadcast %cst_32 : f32 to vector<64x128xf32>
    %45 = arith.maximumf %43, %44 : vector<64x128xf32>
    %c0_33 = arith.constant 0 : index
    %c0_34 = arith.constant 0 : index
    %46 = vector.load %arg13[%c0_33, %c0_34] : memref<64x64xbf16, #tpu.memory_space<vmem>>, vector<64x64xbf16>
    %47 = arith.truncf %45 : vector<64x128xf32> to vector<64x128xbf16>
    %cst_35 = arith.constant dense<0.000000e+00> : vector<64x128xf32>
    %48 = tpu.matmul %46, %47, %cst_35 {dimension_numbers = #tpu.dot_dimension_numbers<[1], [0], [0], [1], [0, 0, 1, 1], [], []>} : vector<64x64xbf16>, vector<64x128xbf16>, vector<64x128xf32> -> vector<64x128xf32>
    %c0_36 = arith.constant 0 : index
    %c0_37 = arith.constant 0 : index
    %49 = vector.load %arg14[%c0_36, %c0_37] : memref<64x1xf32, #tpu.memory_space<vmem>>, vector<64x1xf32>
    %50 = vector.broadcast %49 : vector<64x1xf32> to vector<64x128xf32>
    %51 = arith.addf %48, %50 : vector<64x128xf32>
    %cst_38 = arith.constant 0.000000e+00 : f32
    %52 = vector.broadcast %cst_38 : f32 to vector<64x128xf32>
    %53 = arith.maximumf %51, %52 : vector<64x128xf32>
    %c0_39 = arith.constant 0 : index
    %c0_40 = arith.constant 0 : index
    %54 = vector.load %arg15[%c0_39, %c0_40] : memref<32x64xbf16, #tpu.memory_space<vmem>>, vector<32x64xbf16>
    %55 = arith.truncf %53 : vector<64x128xf32> to vector<64x128xbf16>
    %cst_41 = arith.constant dense<0.000000e+00> : vector<32x128xf32>
    %56 = tpu.matmul %54, %55, %cst_41 {dimension_numbers = #tpu.dot_dimension_numbers<[1], [0], [0], [1], [0, 0, 1, 1], [], []>} : vector<32x64xbf16>, vector<64x128xbf16>, vector<32x128xf32> -> vector<32x128xf32>
    %c0_42 = arith.constant 0 : index
    %c0_43 = arith.constant 0 : index
    %57 = vector.load %arg16[%c0_42, %c0_43] : memref<32x1xf32, #tpu.memory_space<vmem>>, vector<32x1xf32>
    %58 = vector.broadcast %57 : vector<32x1xf32> to vector<32x128xf32>
    %59 = arith.addf %56, %58 : vector<32x128xf32>
    %cst_44 = arith.constant 0.000000e+00 : f32
    %60 = vector.broadcast %cst_44 : f32 to vector<32x128xf32>
    %61 = arith.maximumf %59, %60 : vector<32x128xf32>
    %c0_45 = arith.constant 0 : index
    %c0_46 = arith.constant 0 : index
    %62 = vector.load %arg17[%c0_45, %c0_46] : memref<32x1xf32, #tpu.memory_space<vmem>>, vector<32x1xf32>
    %63 = vector.broadcast %62 : vector<32x1xf32> to vector<32x128xf32>
    %64 = arith.mulf %61, %63 : vector<32x128xf32>
    %cst_47 = arith.constant dense<0.000000e+00> : vector<128xf32>
    %65 = vector.multi_reduction <add>, %64, %cst_47 [0] : vector<32x128xf32> to vector<128xf32>
    %66 = vector.shape_cast %65 : vector<128xf32> to vector<1x128xf32>
    %c0_48 = arith.constant 0 : index
    %c0_49 = arith.constant 0 : index
    %67 = vector.load %arg18[%c0_48, %c0_49] : memref<1x1xf32, #tpu.memory_space<vmem>>, vector<1x1xf32>
    %68 = vector.broadcast %67 : vector<1x1xf32> to vector<1x128xf32>
    %69 = arith.addf %66, %68 : vector<1x128xf32>
    %c1 = arith.constant 1 : index
    %c0_50 = arith.constant 0 : index
    %70 = vector.load %arg19[%c1, %c0_50] : memref<2x128xf32, #tpu.memory_space<vmem>>, vector<1x128xf32>
    tpu.vector_store %arg19[%c1, %c0_50], %69 {strides = array<i32>} : memref<2x128xf32, #tpu.memory_space<vmem>>, vector<1x128xf32>,
    return
  }
  func.func @transform_0(%arg0: i32) -> (i32, i32) {
    %c0_i32 = arith.constant 0 : i32
    %c0_i32_0 = arith.constant 0 : i32
    return %arg0, %c0_i32 : i32, i32
  }
  func.func @transform_1(%arg0: i32) -> (i32, i32) {
    %c0_i32 = arith.constant 0 : i32
    %c0_i32_0 = arith.constant 0 : i32
    %c0_i32_1 = arith.constant 0 : i32
    return %c0_i32, %c0_i32_0 : i32, i32
  }
  func.func @transform_2(%arg0: i32) -> (i32, i32) {
    %c0_i32 = arith.constant 0 : i32
    %c0_i32_0 = arith.constant 0 : i32
    %c0_i32_1 = arith.constant 0 : i32
    return %c0_i32, %c0_i32_0 : i32, i32
  }
  func.func @transform_3(%arg0: i32) -> (i32, i32) {
    %c0_i32 = arith.constant 0 : i32
    %c0_i32_0 = arith.constant 0 : i32
    %c0_i32_1 = arith.constant 0 : i32
    return %c0_i32, %c0_i32_0 : i32, i32
  }
  func.func @transform_4(%arg0: i32) -> (i32, i32) {
    %c0_i32 = arith.constant 0 : i32
    %c0_i32_0 = arith.constant 0 : i32
    %c0_i32_1 = arith.constant 0 : i32
    return %c0_i32, %c0_i32_0 : i32, i32
  }
  func.func @transform_5(%arg0: i32) -> (i32, i32) {
    %c0_i32 = arith.constant 0 : i32
    %c0_i32_0 = arith.constant 0 : i32
    %c0_i32_1 = arith.constant 0 : i32
    return %c0_i32, %c0_i32_0 : i32, i32
  }
  func.func @transform_6(%arg0: i32) -> (i32, i32) {
    %c0_i32 = arith.constant 0 : i32
    %c0_i32_0 = arith.constant 0 : i32
    %c0_i32_1 = arith.constant 0 : i32
    return %c0_i32, %c0_i32_0 : i32, i32
  }
  func.func @transform_7(%arg0: i32) -> (i32, i32) {
    %c0_i32 = arith.constant 0 : i32
    %c0_i32_0 = arith.constant 0 : i32
    %c0_i32_1 = arith.constant 0 : i32
    return %c0_i32, %c0_i32_0 : i32, i32
  }
  func.func @transform_8(%arg0: i32) -> (i32, i32) {
    %c0_i32 = arith.constant 0 : i32
    %c0_i32_0 = arith.constant 0 : i32
    %c0_i32_1 = arith.constant 0 : i32
    return %c0_i32, %c0_i32_0 : i32, i32
  }
  func.func @transform_9(%arg0: i32) -> (i32, i32) {
    %c0_i32 = arith.constant 0 : i32
    %c0_i32_0 = arith.constant 0 : i32
    %c0_i32_1 = arith.constant 0 : i32
    return %c0_i32, %c0_i32_0 : i32, i32
  }
  func.func @transform_10(%arg0: i32) -> (i32, i32) {
    %c0_i32 = arith.constant 0 : i32
    %c0_i32_0 = arith.constant 0 : i32
    %c0_i32_1 = arith.constant 0 : i32
    return %c0_i32, %c0_i32_0 : i32, i32
  }
  func.func @transform_11(%arg0: i32) -> (i32, i32) {
    %c0_i32 = arith.constant 0 : i32
    %c0_i32_0 = arith.constant 0 : i32
    %c0_i32_1 = arith.constant 0 : i32
    return %c0_i32, %c0_i32_0 : i32, i32
  }
  func.func @transform_12(%arg0: i32) -> (i32, i32) {
    %c0_i32 = arith.constant 0 : i32
    %c0_i32_0 = arith.constant 0 : i32
    %c0_i32_1 = arith.constant 0 : i32
    return %c0_i32, %c0_i32_0 : i32, i32
  }
  func.func @transform_13(%arg0: i32) -> (i32, i32) {
    %c0_i32 = arith.constant 0 : i32
    %c0_i32_0 = arith.constant 0 : i32
    %c0_i32_1 = arith.constant 0 : i32
    return %c0_i32, %c0_i32_0 : i32, i32
  }
  func.func @transform_14(%arg0: i32) -> (i32, i32) {
    %c0_i32 = arith.constant 0 : i32
    %c0_i32_0 = arith.constant 0 : i32
    %c0_i32_1 = arith.constant 0 : i32
    return %c0_i32, %c0_i32_0 : i32, i32
  }
  func.func @transform_15(%arg0: i32) -> (i32, i32) {
    %c0_i32 = arith.constant 0 : i32
    %c0_i32_0 = arith.constant 0 : i32
    %c0_i32_1 = arith.constant 0 : i32
    return %c0_i32, %c0_i32_0 : i32, i32
  }
  func.func @transform_16(%arg0: i32) -> (i32, i32) {
    %c0_i32 = arith.constant 0 : i32
    %c0_i32_0 = arith.constant 0 : i32
    %c0_i32_1 = arith.constant 0 : i32
    return %c0_i32, %c0_i32_0 : i32, i32
  }
  func.func @transform_17(%arg0: i32) -> (i32, i32) {
    %c0_i32 = arith.constant 0 : i32
    %c0_i32_0 = arith.constant 0 : i32
    %c0_i32_1 = arith.constant 0 : i32
    return %c0_i32, %c0_i32_0 : i32, i32
  }
  func.func @transform_18(%arg0: i32) -> (i32, i32) {
    %c0_i32 = arith.constant 0 : i32
    %c0_i32_0 = arith.constant 0 : i32
    return %c0_i32, %arg0 : i32, i32
  }
}

</mosaic_0001>

<llo_original>
// kernel: tpu_custom_call.1
$region0: #{tpu_custom_call.1}
  #allocation0 [shape = 'u32[]', space=smem, size = 0x4, offset = 0x4, fixed_abs, tag = 'smem constant byte address 0x4 - core index']
  #allocation1 [shape = 'u32[144,128]{1,0:T(1,128)}', space=vmem, size = 0x12000, scoped, tag = 'internal scratch']
  #allocation2 [shape = 'f32[1,1]{1,0:T(1,128)S(1)}', space=vmem, size = 0x200, scoped, tag = 'scoped memory for tpu_custom_call.1']
  #allocation3 [shape = 'f32[1,1]{1,0:T(1,128)S(1)}', space=vmem, size = 0x200, scoped, tag = 'scoped memory for tpu_custom_call.1']
  %s0 = inlined_call_operand.vmem [shape: f32[128,8], index: 0, kind: input, shape index: {}]
  %s1 = inlined_call_operand.vmem [shape: bf16[64,8], index: 1, kind: input, shape index: {}]
  %s2 = inlined_call_operand.vmem [shape: f32[64,1], index: 2, kind: input, shape index: {}]
  %s3 = inlined_call_operand.vmem [shape: bf16[64,64], index: 3, kind: input, shape index: {}]
  %s4 = inlined_call_operand.vmem [shape: f32[64,1], index: 4, kind: input, shape index: {}]
  %s5 = inlined_call_operand.vmem [shape: bf16[32,64], index: 5, kind: input, shape index: {}]
  %s6 = inlined_call_operand.vmem [shape: f32[32,1], index: 6, kind: input, shape index: {}]
  %s7 = inlined_call_operand.vmem [shape: f32[32,1], index: 7, kind: input, shape index: {}]
  %s8 = inlined_call_operand.<no memory space> [shape: f32[1,1], index: 8, kind: input, shape index: {}]
  %s9 = inlined_call_operand.vmem [shape: bf16[64,8], index: 9, kind: input, shape index: {}]
  %s10 = inlined_call_operand.vmem [shape: f32[64,1], index: 10, kind: input, shape index: {}]
  %s11 = inlined_call_operand.vmem [shape: f32[64,1], index: 11, kind: input, shape index: {}]
  %s12 = inlined_call_operand.vmem [shape: bf16[64,64], index: 12, kind: input, shape index: {}]
  %s13 = inlined_call_operand.vmem [shape: f32[64,1], index: 13, kind: input, shape index: {}]
  %s14 = inlined_call_operand.vmem [shape: bf16[32,64], index: 14, kind: input, shape index: {}]
  %s15 = inlined_call_operand.vmem [shape: f32[32,1], index: 15, kind: input, shape index: {}]
  %s16 = inlined_call_operand.vmem [shape: f32[32,1], index: 16, kind: input, shape index: {}]
  %s17 = inlined_call_operand.<no memory space> [shape: f32[1,1], index: 17, kind: input, shape index: {}]
  %s18 = inlined_call_operand.hbm [shape: f32[2,128], index: 18, kind: output, shape index: {}]
  %s19 = sld [smem:[#allocation0]]
  $region82: #{tpu_custom_call.1} parent=0
    _
  %s21 = ssub.s32 1, %s19
  %s22 = scalar_select 0, %s21, %s19
  %v23 = vstv %s8
  %24 = vst [vmem:[#allocation2] sm:$0x1] %v23
  %v25 = vstv %s17
  %26 = vst [vmem:[#allocation3] sm:$0x1] %v25
  $region1: #{tpu_custom_call.1} parent=0
    #allocation4 [shape = 'u8[1024]{0}', space=vmem, size = 0x400, scoped, tag = 'output window, operand 0, single buffered']
    #allocation5 [shape = 's32[1]{0}', space=sflag, size = 0x4, scoped, tag = 'scoped memory for tpu_custom_call.1']
    %27 = vsyncpa [#allocation5], 0
    // Predicated region
    $region2: #{tpu_custom_call.1} parent=1 // pred_check
      _
    $region3: #{tpu_custom_call.1} parent=1 // pred_check_branch
      %29 = sbr.rel (0) target = $region5
    $region4: #{tpu_custom_call.1} parent=1 // pred_region
      _
    $region5: #{tpu_custom_call.1} parent=1 // pred_fallthru
      _
    // Predicated region
    $region6: #{tpu_custom_call.1} parent=1 // pred_check
      _
    $region7: #{tpu_custom_call.1} parent=1 // pred_check_branch
      %31 = sbr.rel (0) target = $region9
    $region8: #{tpu_custom_call.1} parent=1 // pred_region
      _
    $region9: #{tpu_custom_call.1} parent=1 // pred_fallthru
      _
    // Predicated region
    $region10: #{tpu_custom_call.1} parent=1 // pred_check
      _
    $region11: #{tpu_custom_call.1} parent=1 // pred_check_branch
      %33 = sbr.rel (0) target = $region13
    $region12: #{tpu_custom_call.1} parent=1 // pred_region
      _
    $region13: #{tpu_custom_call.1} parent=1 // pred_fallthru
      _
    // Predicated region
    $region14: #{tpu_custom_call.1} parent=1 // pred_check
      _
    $region15: #{tpu_custom_call.1} parent=1 // pred_check_branch
      %35 = sbr.rel (0) target = $region17
    $region16: #{tpu_custom_call.1} parent=1 // pred_region
      _
    $region17: #{tpu_custom_call.1} parent=1 // pred_fallthru
      _
    // Predicated region
    $region18: #{tpu_custom_call.1} parent=1 // pred_check
      _
    $region19: #{tpu_custom_call.1} parent=1 // pred_check_branch
      %37 = sbr.rel (0) target = $region21
    $region20: #{tpu_custom_call.1} parent=1 // pred_region
      _
    $region21: #{tpu_custom_call.1} parent=1 // pred_fallthru
      _
    // Predicated region
    $region22: #{tpu_custom_call.1} parent=1 // pred_check
      _
    $region23: #{tpu_custom_call.1} parent=1 // pred_check_branch
      %39 = sbr.rel (0) target = $region25
    $region24: #{tpu_custom_call.1} parent=1 // pred_region
      _
    $region25: #{tpu_custom_call.1} parent=1 // pred_fallthru
      _
    // Predicated region
    $region26: #{tpu_custom_call.1} parent=1 // pred_check
      _
    $region27: #{tpu_custom_call.1} parent=1 // pred_check_branch
      %41 = sbr.rel (0) target = $region29
    $region28: #{tpu_custom_call.1} parent=1 // pred_region
      _
    $region29: #{tpu_custom_call.1} parent=1 // pred_fallthru
      _
    // Predicated region
    $region30: #{tpu_custom_call.1} parent=1 // pred_check
      _
    $region31: #{tpu_custom_call.1} parent=1 // pred_check_branch
      %43 = sbr.rel (0) target = $region33
    $region32: #{tpu_custom_call.1} parent=1 // pred_region
      _
    $region33: #{tpu_custom_call.1} parent=1 // pred_fallthru
      _
    // Predicated region
    $region34: #{tpu_custom_call.1} parent=1 // pred_check
      _
    $region35: #{tpu_custom_call.1} parent=1 // pred_check_branch
      %45 = sbr.rel (0) target = $region37
    $region36: #{tpu_custom_call.1} parent=1 // pred_region
      _
    $region37: #{tpu_custom_call.1} parent=1 // pred_fallthru
      _
    // Predicated region
    $region38: #{tpu_custom_call.1} parent=1 // pred_check
      _
    $region39: #{tpu_custom_call.1} parent=1 // pred_check_branch
      %47 = sbr.rel (0) target = $region41
    $region40: #{tpu_custom_call.1} parent=1 // pred_region
      _
    $region41: #{tpu_custom_call.1} parent=1 // pred_fallthru
      _
    // Predicated region
    $region42: #{tpu_custom_call.1} parent=1 // pred_check
      _
    $region43: #{tpu_custom_call.1} parent=1 // pred_check_branch
      %49 = sbr.rel (0) target = $region45
    $region44: #{tpu_custom_call.1} parent=1 // pred_region
      _
    $region45: #{tpu_custom_call.1} parent=1 // pred_fallthru
      _
    // Predicated region
    $region46: #{tpu_custom_call.1} parent=1 // pred_check
      _
    $region47: #{tpu_custom_call.1} parent=1 // pred_check_branch
      %51 = sbr.rel (0) target = $region49
    $region48: #{tpu_custom_call.1} parent=1 // pred_region
      _
    $region49: #{tpu_custom_call.1} parent=1 // pred_fallthru
      _
    // Predicated region
    $region50: #{tpu_custom_call.1} parent=1 // pred_check
      _
    $region51: #{tpu_custom_call.1} parent=1 // pred_check_branch
      %53 = sbr.rel (0) target = $region53
    $region52: #{tpu_custom_call.1} parent=1 // pred_region
      _
    $region53: #{tpu_custom_call.1} parent=1 // pred_fallthru
      _
    // Predicated region
    $region54: #{tpu_custom_call.1} parent=1 // pred_check
      _
    $region55: #{tpu_custom_call.1} parent=1 // pred_check_branch
      %55 = sbr.rel (0) target = $region57
    $region56: #{tpu_custom_call.1} parent=1 // pred_region
      _
    $region57: #{tpu_custom_call.1} parent=1 // pred_fallthru
      _
    // Predicated region
    $region58: #{tpu_custom_call.1} parent=1 // pred_check
      _
    $region59: #{tpu_custom_call.1} parent=1 // pred_check_branch
      %57 = sbr.rel (0) target = $region61
    $region60: #{tpu_custom_call.1} parent=1 // pred_region
      _
    $region61: #{tpu_custom_call.1} parent=1 // pred_fallthru
      _
    // Predicated region
    $region62: #{tpu_custom_call.1} parent=1 // pred_check
      _
    $region63: #{tpu_custom_call.1} parent=1 // pred_check_branch
      %59 = sbr.rel (0) target = $region65
    $region64: #{tpu_custom_call.1} parent=1 // pred_region
      _
    $region65: #{tpu_custom_call.1} parent=1 // pred_fallthru
      _
    // Predicated region
    $region66: #{tpu_custom_call.1} parent=1 // pred_check
      _
    $region67: #{tpu_custom_call.1} parent=1 // pred_check_branch
      %61 = sbr.rel (0) target = $region69
    $region68: #{tpu_custom_call.1} parent=1 // pred_region
      _
    $region69: #{tpu_custom_call.1} parent=1 // pred_fallthru
      _
    // Predicated region
    $region70: #{tpu_custom_call.1} parent=1 // pred_check
      _
    $region71: #{tpu_custom_call.1} parent=1 // pred_check_branch
      %63 = sbr.rel (0) target = $region73
    $region72: #{tpu_custom_call.1} parent=1 // pred_region
      _
    $region73: #{tpu_custom_call.1} parent=1 // pred_fallthru
      _
    %v65 = vld [vmem:[%s0] sm:$0xff]
    %v66 = vld [vmem:[%s0 + $0x8] sm:$0xff]
    %v67 = vld [vmem:[%s0 + $0x10] sm:$0xff]
    %v68 = vld [vmem:[%s0 + $0x18] sm:$0xff]
    %v69 = vld [vmem:[%s0 + $0x20] sm:$0xff]
    %v70 = vld [vmem:[%s0 + $0x28] sm:$0xff]
    %v71 = vld [vmem:[%s0 + $0x30] sm:$0xff]
    %v72 = vld [vmem:[%s0 + $0x38] sm:$0xff]
    %v73 = vld [vmem:[%s0 + $0x40] sm:$0xff]
    %v74 = vld [vmem:[%s0 + $0x48] sm:$0xff]
    %v75 = vld [vmem:[%s0 + $0x50] sm:$0xff]
    %v76 = vld [vmem:[%s0 + $0x58] sm:$0xff]
    %v77 = vld [vmem:[%s0 + $0x60] sm:$0xff]
    %v78 = vld [vmem:[%s0 + $0x68] sm:$0xff]
    %v79 = vld [vmem:[%s0 + $0x70] sm:$0xff]
    %v80 = vld [vmem:[%s0 + $0x78] sm:$0xff]
    %v81 = vpack.c.bf16 %v66, %v65
    %v82 = vpack.c.bf16 %v68, %v67
    %v83 = vpack.c.bf16 %v70, %v69
    %v84 = vpack.c.bf16 %v72, %v71
    %v85 = vpack.c.bf16 %v74, %v73
    %v86 = vpack.c.bf16 %v76, %v75
    %v87 = vpack.c.bf16 %v78, %v77
    %v88 = vpack.c.bf16 %v80, %v79
    %v89 = vld [vmem:[%s1] sm:$0xf]
    %v90 = vld [vmem:[%s1 + $0x4] sm:$0xf]
    %v91 = vld [vmem:[%s1 + $0x8] sm:$0xf]
    %v92 = vld [vmem:[%s1 + $0xc] sm:$0xf]
    %v93 = vld [vmem:[%s1 + $0x10] sm:$0xf]
    %v94 = vld [vmem:[%s1 + $0x14] sm:$0xf]
    %v95 = vld [vmem:[%s1 + $0x18] sm:$0xf]
    %v96 = vld [vmem:[%s1 + $0x1c] sm:$0xf]
    %v97 = vld [vmem:[%s2] sm:$0xff]
    %v98 = vld [vmem:[%s2 + $0x8] sm:$0xff]
    %v99 = vld [vmem:[%s2 + $0x10] sm:$0xff]
    %v100 = vld [vmem:[%s2 + $0x18] sm:$0xff]
    %v101 = vld [vmem:[%s2 + $0x20] sm:$0xff]
    %v102 = vld [vmem:[%s2 + $0x28] sm:$0xff]
    %v103 = vld [vmem:[%s2 + $0x30] sm:$0xff]
    %v104 = vld [vmem:[%s2 + $0x38] sm:$0xff]
    %106 = vset.pattern.permute.xlu0 0
    %107 = vperm.xlu0 %106, %v97
    %v108 = vpop.permute.xlu0 %107
    %111 = vset.pattern.permute.xlu0 0
    %112 = vperm.xlu0 %111, %v98
    %v113 = vpop.permute.xlu0 %112
    %116 = vset.pattern.permute.xlu0 0
    %117 = vperm.xlu0 %116, %v99
    %v118 = vpop.permute.xlu0 %117
    %121 = vset.pattern.permute.xlu0 0
    %122 = vperm.xlu0 %121, %v100
    %v123 = vpop.permute.xlu0 %122
    %126 = vset.pattern.permute.xlu0 0
    %127 = vperm.xlu0 %126, %v101
    %v128 = vpop.permute.xlu0 %127
    %131 = vset.pattern.permute.xlu0 0
    %132 = vperm.xlu0 %131, %v102
    %v133 = vpop.permute.xlu0 %132
    %136 = vset.pattern.permute.xlu0 0
    %137 = vperm.xlu0 %136, %v103
    %v138 = vpop.permute.xlu0 %137
    %141 = vset.pattern.permute.xlu0 0
    %142 = vperm.xlu0 %141, %v104
    %v143 = vpop.permute.xlu0 %142
    %v153 = vunpack.c.l.b16 %v89
    %v154 = vunpack.c.l.b16 %v90
    %v155 = vunpack.c.l.b16 %v91
    %v156 = vunpack.c.l.b16 %v92
    %v157 = vunpack.c.l.b16 %v93
    %v158 = vunpack.c.l.b16 %v94
    %v159 = vunpack.c.l.b16 %v95
    %v160 = vunpack.c.l.b16 %v96
    %v161 = vpack.c.b16 %v154, %v153
    %v162 = vpack.c.b16 %v156, %v155
    %v163 = vpack.c.b16 %v158, %v157
    %v164 = vpack.c.b16 %v160, %v159
    %vm165 = vcmask 64512
    %v167 = vsel %vm165, %v161, 0
    %v170 = vsel %vm165, %v162, 0
    %v173 = vsel %vm165, %v163, 0
    %v176 = vsel %vm165, %v164, 0
    %v179 = vsel %vm165, %v81, 0
    %v182 = vsel %vm165, %v82, 0
    %v185 = vsel %vm165, %v83, 0
    %v188 = vsel %vm165, %v84, 0
    %v191 = vsel %vm165, %v85, 0
    %v194 = vsel %vm165, %v86, 0
    %v197 = vsel %vm165, %v87, 0
    %v200 = vsel %vm165, %v88, 0
    %202 = vmatprep.subr.bf16.mxu0 0
    %203 = vmatpush1.bf16.xpose.msra.mxu0 %v179
    %204 = vmatprep.subr.bf16.mxu0 0
    %205 = vmatpush1.bf16.xpose.msra.mxu0 %v182
    %206 = vmatprep.subr.bf16.mxu0 0
    %207 = vmatpush1.bf16.xpose.msra.mxu0 %v185
    %208 = vmatprep.subr.bf16.mxu0 0
    %209 = vmatpush1.bf16.xpose.msra.mxu0 %v188
    %210 = vmatprep.subr.bf16.mxu0 0
    %211 = vmatpush1.bf16.xpose.msra.mxu0 %v191
    %212 = vmatprep.subr.bf16.mxu0 0
    %213 = vmatpush1.bf16.xpose.msra.mxu0 %v194
    %214 = vmatprep.subr.bf16.mxu0 0
    %215 = vmatpush1.bf16.xpose.msra.mxu0 %v197
    %216 = vmatprep.subr.bf16.mxu0 0
    %217 = vmatpush1.bf16.xpose.msra.mxu0 %v200
    %218 = vmatprep.subr.bf16.mxu0 0
    %219 = vmatpush1.bf16.xpose.msra.mxu0 0
    %220 = vmatprep.subr.bf16.mxu0 0
    %221 = vmatpush1.bf16.xpose.msra.mxu0 0
    %222 = vmatprep.subr.bf16.mxu0 0
    %223 = vmatpush1.bf16.xpose.msra.mxu0 0
    %224 = vmatprep.subr.bf16.mxu0 0
    %225 = vmatpush1.bf16.xpose.msra.mxu0 0
    %226 = vmatprep.subr.bf16.mxu0 0
    %227 = vmatpush1.bf16.xpose.msra.mxu0 0
    %228 = vmatprep.subr.bf16.mxu0 0
    %229 = vmatpush1.bf16.xpose.msra.mxu0 0
    %230 = vmatprep.subr.bf16.mxu0 0
    %231 = vmatpush1.bf16.xpose.msra.mxu0 0
    %232 = vmatprep.subr.bf16.mxu0 0
    %233 = vmatpush1.bf16.xpose.msra.mxu0 0
    %234 = vmatprep.mubr.bf16.mxu0 0
    %235 = vmatmul.mubr.bf16.gmra.mrb[0].mxu0 %v167
    %v236 = vpop.f32.mrb[0].mxu0
    %v237 = vadd.f32 %v108, %v236
    %v238 = vpop.f32.mrb[0].mxu0
    %v239 = vpop.f32.mrb[0].mxu0
    %v240 = vadd.f32 %v113, %v239
    %v241 = vpop.f32.mrb[0].mxu0
    %242 = vmatprep.mubr.bf16.mxu0 0
    %243 = vmatmul.mubr.bf16.gmra.mrb[0].mxu0 %v170
    %v244 = vpop.f32.mrb[0].mxu0
    %v245 = vadd.f32 %v118, %v244
    %v246 = vpop.f32.mrb[0].mxu0
    %v247 = vpop.f32.mrb[0].mxu0
    %v248 = vadd.f32 %v123, %v247
    %v249 = vpop.f32.mrb[0].mxu0
    %250 = vmatprep.mubr.bf16.mxu0 0
    %251 = vmatmul.mubr.bf16.gmra.mrb[0].mxu0 %v173
    %v252 = vpop.f32.mrb[0].mxu0
    %v253 = vadd.f32 %v128, %v252
    %v254 = vpop.f32.mrb[0].mxu0
    %v255 = vpop.f32.mrb[0].mxu0
    %v256 = vadd.f32 %v133, %v255
    %v257 = vpop.f32.mrb[0].mxu0
    %258 = vmatprep.mubr.bf16.mxu0 0
    %259 = vmatmul.mubr.bf16.gmra.mrb[0].mxu0 %v176
    %v260 = vpop.f32.mrb[0].mxu0
    %v261 = vadd.f32 %v138, %v260
    %v262 = vpop.f32.mrb[0].mxu0
    %v263 = vpop.f32.mrb[0].mxu0
    %v264 = vadd.f32 %v143, %v263
    %v265 = vpop.f32.mrb[0].mxu0
    %266 = vdwg.mxu0
    %v267 = vmax.f32 %v237, 0.0
    %v268 = vmax.f32 %v240, 0.0
    %v269 = vmax.f32 %v245, 0.0
    %v270 = vmax.f32 %v248, 0.0
    %v271 = vmax.f32 %v253, 0.0
    %v272 = vmax.f32 %v256, 0.0
    %v273 = vmax.f32 %v261, 0.0
    %v274 = vmax.f32 %v264, 0.0
    %v275 = vld [vmem:[%s3] sm:$0xf]
    %v276 = vld [vmem:[%s3 + $0x4] sm:$0xf]
    %v277 = vld [vmem:[%s3 + $0x8] sm:$0xf]
    %v278 = vld [vmem:[%s3 + $0xc] sm:$0xf]
    %v279 = vld [vmem:[%s3 + $0x10] sm:$0xf]
    %v280 = vld [vmem:[%s3 + $0x14] sm:$0xf]
    %v281 = vld [vmem:[%s3 + $0x18] sm:$0xf]
    %v282 = vld [vmem:[%s3 + $0x1c] sm:$0xf]
    %v283 = vpack.c.bf16 %v268, %v267
    %v284 = vpack.c.bf16 %v270, %v269
    %v285 = vpack.c.bf16 %v272, %v271
    %v286 = vpack.c.bf16 %v274, %v273
    %v287 = vld [vmem:[%s4] sm:$0xff]
    %v288 = vld [vmem:[%s4 + $0x8] sm:$0xff]
    %v289 = vld [vmem:[%s4 + $0x10] sm:$0xff]
    %v290 = vld [vmem:[%s4 + $0x18] sm:$0xff]
    %v291 = vld [vmem:[%s4 + $0x20] sm:$0xff]
    %v292 = vld [vmem:[%s4 + $0x28] sm:$0xff]
    %v293 = vld [vmem:[%s4 + $0x30] sm:$0xff]
    %v294 = vld [vmem:[%s4 + $0x38] sm:$0xff]
    %296 = vset.pattern.permute.xlu0 0
    %297 = vperm.xlu0 %296, %v287
    %v298 = vpop.permute.xlu0 %297
    %301 = vset.pattern.permute.xlu0 0
    %302 = vperm.xlu0 %301, %v288
    %v303 = vpop.permute.xlu0 %302
    %306 = vset.pattern.permute.xlu0 0
    %307 = vperm.xlu0 %306, %v289
    %v308 = vpop.permute.xlu0 %307
    %311 = vset.pattern.permute.xlu0 0
    %312 = vperm.xlu0 %311, %v290
    %v313 = vpop.permute.xlu0 %312
    %316 = vset.pattern.permute.xlu0 0
    %317 = vperm.xlu0 %316, %v291
    %v318 = vpop.permute.xlu0 %317
    %321 = vset.pattern.permute.xlu0 0
    %322 = vperm.xlu0 %321, %v292
    %v323 = vpop.permute.xlu0 %322
    %326 = vset.pattern.permute.xlu0 0
    %327 = vperm.xlu0 %326, %v293
    %v328 = vpop.permute.xlu0 %327
    %331 = vset.pattern.permute.xlu0 0
    %332 = vperm.xlu0 %331, %v294
    %v333 = vpop.permute.xlu0 %332
    %v343 = vunpack.c.l.b16 %v275
    %v344 = vunpack.c.l.b16 %v276
    %v345 = vunpack.c.l.b16 %v277
    %v346 = vunpack.c.l.b16 %v278
    %v347 = vunpack.c.l.b16 %v279
    %v348 = vunpack.c.l.b16 %v280
    %v349 = vunpack.c.l.b16 %v281
    %v350 = vunpack.c.l.b16 %v282
    %v351 = vpack.c.b16 %v344, %v343
    %v352 = vpack.c.b16 %v346, %v345
    %v353 = vpack.c.b16 %v348, %v347
    %v354 = vpack.c.b16 %v350, %v349
    %vm355 = vcmask 523264
    %v357 = vsel %vm355, %v351, 0
    %v360 = vsel %vm355, %v352, 0
    %v363 = vsel %vm355, %v353, 0
    %v366 = vsel %vm355, %v354, 0
    %368 = vmatprep.subr.bf16.mxu0 0
    %369 = vmatpush1.bf16.msra.mxu0 %v283
    %370 = vmatprep.subr.bf16.mxu0 0
    %371 = vmatpush1.bf16.msra.mxu0 %v284
    %372 = vmatprep.subr.bf16.mxu0 0
    %373 = vmatpush1.bf16.msra.mxu0 %v285
    %374 = vmatprep.subr.bf16.mxu0 0
    %375 = vmatpush1.bf16.msra.mxu0 %v286
    %376 = vmatprep.subr.bf16.mxu0 0
    %377 = vmatpush1.bf16.msra.mxu0 0
    %378 = vmatprep.subr.bf16.mxu0 0
    %379 = vmatpush1.bf16.msra.mxu0 0
    %380 = vmatprep.subr.bf16.mxu0 0
    %381 = vmatpush1.bf16.msra.mxu0 0
    %382 = vmatprep.subr.bf16.mxu0 0
    %383 = vmatpush1.bf16.msra.mxu0 0
    %384 = vmatprep.subr.bf16.mxu0 0
    %385 = vmatpush1.bf16.msra.mxu0 0
    %386 = vmatprep.subr.bf16.mxu0 0
    %387 = vmatpush1.bf16.msra.mxu0 0
    %388 = vmatprep.subr.bf16.mxu0 0
    %389 = vmatpush1.bf16.msra.mxu0 0
    %390 = vmatprep.subr.bf16.mxu0 0
    %391 = vmatpush1.bf16.msra.mxu0 0
    %392 = vmatprep.subr.bf16.mxu0 0
    %393 = vmatpush1.bf16.msra.mxu0 0
    %394 = vmatprep.subr.bf16.mxu0 0
    %395 = vmatpush1.bf16.msra.mxu0 0
    %396 = vmatprep.subr.bf16.mxu0 0
    %397 = vmatpush1.bf16.msra.mxu0 0
    %398 = vmatprep.subr.bf16.mxu0 0
    %399 = vmatpush1.bf16.msra.mxu0 0
    %400 = vmatprep.mubr.bf16.mxu0 0
    %401 = vmatmul.mubr.bf16.gmra.mrb[0].mxu0 %v357
    %v402 = vpop.f32.mrb[0].mxu0
    %v403 = vadd.f32 %v298, %v402
    %v404 = vpop.f32.mrb[0].mxu0
    %v405 = vpop.f32.mrb[0].mxu0
    %v406 = vadd.f32 %v303, %v405
    %v407 = vpop.f32.mrb[0].mxu0
    %408 = vmatprep.mubr.bf16.mxu0 0
    %409 = vmatmul.mubr.bf16.gmra.mrb[0].mxu0 %v360
    %v410 = vpop.f32.mrb[0].mxu0
    %v411 = vadd.f32 %v308, %v410
    %v412 = vpop.f32.mrb[0].mxu0
    %v413 = vpop.f32.mrb[0].mxu0
    %v414 = vadd.f32 %v313, %v413
    %v415 = vpop.f32.mrb[0].mxu0
    %416 = vmatprep.mubr.bf16.mxu0 0
    %417 = vmatmul.mubr.bf16.gmra.mrb[0].mxu0 %v363
    %v418 = vpop.f32.mrb[0].mxu0
    %v419 = vadd.f32 %v318, %v418
    %v420 = vpop.f32.mrb[0].mxu0
    %v421 = vpop.f32.mrb[0].mxu0
    %v422 = vadd.f32 %v323, %v421
    %v423 = vpop.f32.mrb[0].mxu0
    %424 = vmatprep.mubr.bf16.mxu0 0
    %425 = vmatmul.mubr.bf16.gmra.mrb[0].mxu0 %v366
    %v426 = vpop.f32.mrb[0].mxu0
    %v427 = vadd.f32 %v328, %v426
    %v428 = vpop.f32.mrb[0].mxu0
    %v429 = vpop.f32.mrb[0].mxu0
    %v430 = vadd.f32 %v333, %v429
    %v431 = vpop.f32.mrb[0].mxu0
    %432 = vdwg.mxu0
    %v433 = vmax.f32 %v403, 0.0
    %v434 = vmax.f32 %v406, 0.0
    %v435 = vmax.f32 %v411, 0.0
    %v436 = vmax.f32 %v414, 0.0
    %v437 = vmax.f32 %v419, 0.0
    %v438 = vmax.f32 %v422, 0.0
    %v439 = vmax.f32 %v427, 0.0
    %v440 = vmax.f32 %v430, 0.0
    %v441 = vld [vmem:[%s5] sm:$0xf]
    %v442 = vld [vmem:[%s5 + $0x4] sm:$0xf]
    %v443 = vld [vmem:[%s5 + $0x8] sm:$0xf]
    %v444 = vld [vmem:[%s5 + $0xc] sm:$0xf]
    %v445 = vpack.c.bf16 %v434, %v433
    %v446 = vpack.c.bf16 %v436, %v435
    %v447 = vpack.c.bf16 %v438, %v437
    %v448 = vpack.c.bf16 %v440, %v439
    %v449 = vld [vmem:[%s6] sm:$0xff]
    %v450 = vld [vmem:[%s6 + $0x8] sm:$0xff]
    %v451 = vld [vmem:[%s6 + $0x10] sm:$0xff]
    %v452 = vld [vmem:[%s6 + $0x18] sm:$0xff]
    %454 = vset.pattern.permute.xlu0 0
    %455 = vperm.xlu0 %454, %v449
    %v456 = vpop.permute.xlu0 %455
    %459 = vset.pattern.permute.xlu0 0
    %460 = vperm.xlu0 %459, %v450
    %v461 = vpop.permute.xlu0 %460
    %464 = vset.pattern.permute.xlu0 0
    %465 = vperm.xlu0 %464, %v451
    %v466 = vpop.permute.xlu0 %465
    %469 = vset.pattern.permute.xlu0 0
    %470 = vperm.xlu0 %469, %v452
    %v471 = vpop.permute.xlu0 %470
    %v477 = vunpack.c.l.b16 %v441
    %v478 = vunpack.c.l.b16 %v442
    %v479 = vunpack.c.l.b16 %v443
    %v480 = vunpack.c.l.b16 %v444
    %v481 = vpack.c.b16 %v478, %v477
    %v482 = vpack.c.b16 %v480, %v479
    %v484 = vsel %vm355, %v481, 0
    %v487 = vsel %vm355, %v482, 0
    %489 = vmatprep.subr.bf16.mxu0 0
    %490 = vmatpush1.bf16.msra.mxu0 %v445
    %491 = vmatprep.subr.bf16.mxu0 0
    %492 = vmatpush1.bf16.msra.mxu0 %v446
    %493 = vmatprep.subr.bf16.mxu0 0
    %494 = vmatpush1.bf16.msra.mxu0 %v447
    %495 = vmatprep.subr.bf16.mxu0 0
    %496 = vmatpush1.bf16.msra.mxu0 %v448
    %497 = vmatprep.subr.bf16.mxu0 0
    %498 = vmatpush1.bf16.msra.mxu0 0
    %499 = vmatprep.subr.bf16.mxu0 0
    %500 = vmatpush1.bf16.msra.mxu0 0
    %501 = vmatprep.subr.bf16.mxu0 0
    %502 = vmatpush1.bf16.msra.mxu0 0
    %503 = vmatprep.subr.bf16.mxu0 0
    %504 = vmatpush1.bf16.msra.mxu0 0
    %505 = vmatprep.subr.bf16.mxu0 0
    %506 = vmatpush1.bf16.msra.mxu0 0
    %507 = vmatprep.subr.bf16.mxu0 0
    %508 = vmatpush1.bf16.msra.mxu0 0
    %509 = vmatprep.subr.bf16.mxu0 0
    %510 = vmatpush1.bf16.msra.mxu0 0
    %511 = vmatprep.subr.bf16.mxu0 0
    %512 = vmatpush1.bf16.msra.mxu0 0
    %513 = vmatprep.subr.bf16.mxu0 0
    %514 = vmatpush1.bf16.msra.mxu0 0
    %515 = vmatprep.subr.bf16.mxu0 0
    %516 = vmatpush1.bf16.msra.mxu0 0
    %517 = vmatprep.subr.bf16.mxu0 0
    %518 = vmatpush1.bf16.msra.mxu0 0
    %519 = vmatprep.subr.bf16.mxu0 0
    %520 = vmatpush1.bf16.msra.mxu0 0
    %521 = vmatprep.mubr.bf16.mxu0 0
    %522 = vmatmul.mubr.bf16.gmra.mrb[0].mxu0 %v484
    %v523 = vpop.f32.mrb[0].mxu0
    %v524 = vadd.f32 %v456, %v523
    %v525 = vpop.f32.mrb[0].mxu0
    %v526 = vpop.f32.mrb[0].mxu0
    %v527 = vadd.f32 %v461, %v526
    %v528 = vpop.f32.mrb[0].mxu0
    %529 = vmatprep.mubr.bf16.mxu0 0
    %530 = vmatmul.mubr.bf16.gmra.mrb[0].mxu0 %v487
    %v531 = vpop.f32.mrb[0].mxu0
    %v532 = vadd.f32 %v466, %v531
    %v533 = vpop.f32.mrb[0].mxu0
    %v534 = vpop.f32.mrb[0].mxu0
    %v535 = vadd.f32 %v471, %v534
    %v536 = vpop.f32.mrb[0].mxu0
    %537 = vdwg.mxu0
    %v538 = vmax.f32 %v524, 0.0
    %v539 = vmax.f32 %v527, 0.0
    %v540 = vmax.f32 %v532, 0.0
    %v541 = vmax.f32 %v535, 0.0
    %v542 = vld [vmem:[%s7] sm:$0xff]
    %v543 = vld [vmem:[%s7 + $0x8] sm:$0xff]
    %v544 = vld [vmem:[%s7 + $0x10] sm:$0xff]
    %v545 = vld [vmem:[%s7 + $0x18] sm:$0xff]
    %547 = vset.pattern.permute.xlu0 0
    %548 = vperm.xlu0 %547, %v542
    %v549 = vpop.permute.xlu0 %548
    %552 = vset.pattern.permute.xlu0 0
    %553 = vperm.xlu0 %552, %v543
    %v554 = vpop.permute.xlu0 %553
    %557 = vset.pattern.permute.xlu0 0
    %558 = vperm.xlu0 %557, %v544
    %v559 = vpop.permute.xlu0 %558
    %562 = vset.pattern.permute.xlu0 0
    %563 = vperm.xlu0 %562, %v545
    %v564 = vpop.permute.xlu0 %563
    %v566 = vmul.f32 %v538, %v549
    %v567 = vmul.f32 %v539, %v554
    %v568 = vmul.f32 %v540, %v559
    %v569 = vmul.f32 %v541, %v564
    %v570 = vadd.f32 %v566, %v567
    %v571 = vadd.f32 %v570, %v568
    %v572 = vadd.f32 %v571, %v569
    %v573 = vrot.slane %v572, 4
    %v574 = vadd.f32 %v572, %v573
    %v575 = vrot.slane %v574, 2
    %v576 = vadd.f32 %v574, %v575
    %v577 = vrot.slane %v576, 1
    %v578 = vadd.f32 %v576, %v577
    %v579 = vld [vmem:[#allocation2] sm:$0x1]
    %581 = vset.pattern.permute.xlu0 0
    %582 = vperm.xlu0 %581, %v579
    %v583 = vpop.permute.xlu0 %582
    %v585 = vlaneseq
    %v586 = vshrl.u32 %v585, 7
    %v587 = vsub.s32 0, %v586
    %v588 = vrot.slane %v583, %v587
    %v589 = vadd.f32 %v578, %v588
    %590 = vst [vmem:[#allocation4] sm:$0x1] %v589
    %v591 = vld [vmem:[%s9] sm:$0xf]
    %v592 = vld [vmem:[%s9 + $0x4] sm:$0xf]
    %v593 = vld [vmem:[%s9 + $0x8] sm:$0xf]
    %v594 = vld [vmem:[%s9 + $0xc] sm:$0xf]
    %v595 = vld [vmem:[%s9 + $0x10] sm:$0xf]
    %v596 = vld [vmem:[%s9 + $0x14] sm:$0xf]
    %v597 = vld [vmem:[%s9 + $0x18] sm:$0xf]
    %v598 = vld [vmem:[%s9 + $0x1c] sm:$0xf]
    %v599 = vld [vmem:[%s11] sm:$0xff]
    %v600 = vld [vmem:[%s11 + $0x8] sm:$0xff]
    %v601 = vld [vmem:[%s11 + $0x10] sm:$0xff]
    %v602 = vld [vmem:[%s11 + $0x18] sm:$0xff]
    %v603 = vld [vmem:[%s11 + $0x20] sm:$0xff]
    %v604 = vld [vmem:[%s11 + $0x28] sm:$0xff]
    %v605 = vld [vmem:[%s11 + $0x30] sm:$0xff]
    %v606 = vld [vmem:[%s11 + $0x38] sm:$0xff]
    %608 = vset.pattern.permute.xlu0 0
    %609 = vperm.xlu0 %608, %v599
    %v610 = vpop.permute.xlu0 %609
    %613 = vset.pattern.permute.xlu0 0
    %614 = vperm.xlu0 %613, %v600
    %v615 = vpop.permute.xlu0 %614
    %618 = vset.pattern.permute.xlu0 0
    %619 = vperm.xlu0 %618, %v601
    %v620 = vpop.permute.xlu0 %619
    %623 = vset.pattern.permute.xlu0 0
    %624 = vperm.xlu0 %623, %v602
    %v625 = vpop.permute.xlu0 %624
    %628 = vset.pattern.permute.xlu0 0
    %629 = vperm.xlu0 %628, %v603
    %v630 = vpop.permute.xlu0 %629
    %633 = vset.pattern.permute.xlu0 0
    %634 = vperm.xlu0 %633, %v604
    %v635 = vpop.permute.xlu0 %634
    %638 = vset.pattern.permute.xlu0 0
    %639 = vperm.xlu0 %638, %v605
    %v640 = vpop.permute.xlu0 %639
    %643 = vset.pattern.permute.xlu0 0
    %644 = vperm.xlu0 %643, %v606
    %v645 = vpop.permute.xlu0 %644
    %v655 = vunpack.c.l.b16 %v591
    %v656 = vunpack.c.l.b16 %v592
    %v657 = vunpack.c.l.b16 %v593
    %v658 = vunpack.c.l.b16 %v594
    %v659 = vunpack.c.l.b16 %v595
    %v660 = vunpack.c.l.b16 %v596
    %v661 = vunpack.c.l.b16 %v597
    %v662 = vunpack.c.l.b16 %v598
    %v663 = vpack.c.b16 %v656, %v655
    %v664 = vpack.c.b16 %v658, %v657
    %v665 = vpack.c.b16 %v660, %v659
    %v666 = vpack.c.b16 %v662, %v661
    %v668 = vsel %vm165, %v663, 0
    %v671 = vsel %vm165, %v664, 0
    %v674 = vsel %vm165, %v665, 0
    %v677 = vsel %vm165, %v666, 0
    %679 = vmatprep.subr.bf16.mxu0 0
    %680 = vmatpush1.bf16.xpose.msra.mxu0 %v179
    %681 = vmatprep.subr.bf16.mxu0 0
    %682 = vmatpush1.bf16.xpose.msra.mxu0 %v182
    %683 = vmatprep.subr.bf16.mxu0 0
    %684 = vmatpush1.bf16.xpose.msra.mxu0 %v185
    %685 = vmatprep.subr.bf16.mxu0 0
    %686 = vmatpush1.bf16.xpose.msra.mxu0 %v188
    %687 = vmatprep.subr.bf16.mxu0 0
    %688 = vmatpush1.bf16.xpose.msra.mxu0 %v191
    %689 = vmatprep.subr.bf16.mxu0 0
    %690 = vmatpush1.bf16.xpose.msra.mxu0 %v194
    %691 = vmatprep.subr.bf16.mxu0 0
    %692 = vmatpush1.bf16.xpose.msra.mxu0 %v197
    %693 = vmatprep.subr.bf16.mxu0 0
    %694 = vmatpush1.bf16.xpose.msra.mxu0 %v200
    %695 = vmatprep.subr.bf16.mxu0 0
    %696 = vmatpush1.bf16.xpose.msra.mxu0 0
    %697 = vmatprep.subr.bf16.mxu0 0
    %698 = vmatpush1.bf16.xpose.msra.mxu0 0
    %699 = vmatprep.subr.bf16.mxu0 0
    %700 = vmatpush1.bf16.xpose.msra.mxu0 0
    %701 = vmatprep.subr.bf16.mxu0 0
    %702 = vmatpush1.bf16.xpose.msra.mxu0 0
    %703 = vmatprep.subr.bf16.mxu0 0
    %704 = vmatpush1.bf16.xpose.msra.mxu0 0
    %705 = vmatprep.subr.bf16.mxu0 0
    %706 = vmatpush1.bf16.xpose.msra.mxu0 0
    %707 = vmatprep.subr.bf16.mxu0 0
    %708 = vmatpush1.bf16.xpose.msra.mxu0 0
    %709 = vmatprep.subr.bf16.mxu0 0
    %710 = vmatpush1.bf16.xpose.msra.mxu0 0
    %711 = vmatprep.mubr.bf16.mxu0 0
    %712 = vmatmul.mubr.bf16.gmra.mrb[0].mxu0 %v668
    %v713 = vpop.f32.mrb[0].mxu0
    %v714 = vadd.f32 %v610, %v713
    %v715 = vpop.f32.mrb[0].mxu0
    %v716 = vpop.f32.mrb[0].mxu0
    %v717 = vadd.f32 %v615, %v716
    %v718 = vpop.f32.mrb[0].mxu0
    %719 = vmatprep.mubr.bf16.mxu0 0
    %720 = vmatmul.mubr.bf16.gmra.mrb[0].mxu0 %v671
    %v721 = vpop.f32.mrb[0].mxu0
    %v722 = vadd.f32 %v620, %v721
    %v723 = vpop.f32.mrb[0].mxu0
    %v724 = vpop.f32.mrb[0].mxu0
    %v725 = vadd.f32 %v625, %v724
    %v726 = vpop.f32.mrb[0].mxu0
    %727 = vmatprep.mubr.bf16.mxu0 0
    %728 = vmatmul.mubr.bf16.gmra.mrb[0].mxu0 %v674
    %v729 = vpop.f32.mrb[0].mxu0
    %v730 = vadd.f32 %v630, %v729
    %v731 = vpop.f32.mrb[0].mxu0
    %v732 = vpop.f32.mrb[0].mxu0
    %v733 = vadd.f32 %v635, %v732
    %v734 = vpop.f32.mrb[0].mxu0
    %735 = vmatprep.mubr.bf16.mxu0 0
    %736 = vmatmul.mubr.bf16.gmra.mrb[0].mxu0 %v677
    %v737 = vpop.f32.mrb[0].mxu0
    %v738 = vadd.f32 %v640, %v737
    %v739 = vpop.f32.mrb[0].mxu0
    %v740 = vpop.f32.mrb[0].mxu0
    %v741 = vadd.f32 %v645, %v740
    %v742 = vpop.f32.mrb[0].mxu0
    %743 = vdwg.mxu0
    %v744 = vld [vmem:[%s10] sm:$0xff]
    %v745 = vld [vmem:[%s10 + $0x8] sm:$0xff]
    %v746 = vld [vmem:[%s10 + $0x10] sm:$0xff]
    %v747 = vld [vmem:[%s10 + $0x18] sm:$0xff]
    %v748 = vld [vmem:[%s10 + $0x20] sm:$0xff]
    %v749 = vld [vmem:[%s10 + $0x28] sm:$0xff]
    %v750 = vld [vmem:[%s10 + $0x30] sm:$0xff]
    %v751 = vld [vmem:[%s10 + $0x38] sm:$0xff]
    %753 = vset.pattern.permute.xlu0 0
    %754 = vperm.xlu0 %753, %v744
    %v755 = vpop.permute.xlu0 %754
    %758 = vset.pattern.permute.xlu0 0
    %759 = vperm.xlu0 %758, %v745
    %v760 = vpop.permute.xlu0 %759
    %763 = vset.pattern.permute.xlu0 0
    %764 = vperm.xlu0 %763, %v746
    %v765 = vpop.permute.xlu0 %764
    %768 = vset.pattern.permute.xlu0 0
    %769 = vperm.xlu0 %768, %v747
    %v770 = vpop.permute.xlu0 %769
    %773 = vset.pattern.permute.xlu0 0
    %774 = vperm.xlu0 %773, %v748
    %v775 = vpop.permute.xlu0 %774
    %778 = vset.pattern.permute.xlu0 0
    %779 = vperm.xlu0 %778, %v749
    %v780 = vpop.permute.xlu0 %779
    %783 = vset.pattern.permute.xlu0 0
    %784 = vperm.xlu0 %783, %v750
    %v785 = vpop.permute.xlu0 %784
    %788 = vset.pattern.permute.xlu0 0
    %789 = vperm.xlu0 %788, %v751
    %v790 = vpop.permute.xlu0 %789
    %v792 = vmul.f32 %v755, %v589
    %v793 = vmul.f32 %v760, %v589
    %v794 = vmul.f32 %v765, %v589
    %v795 = vmul.f32 %v770, %v589
    %v796 = vmul.f32 %v775, %v589
    %v797 = vmul.f32 %v780, %v589
    %v798 = vmul.f32 %v785, %v589
    %v799 = vmul.f32 %v790, %v589
    %v800 = vadd.f32 %v714, %v792
    %v801 = vadd.f32 %v717, %v793
    %v802 = vadd.f32 %v722, %v794
    %v803 = vadd.f32 %v725, %v795
    %v804 = vadd.f32 %v730, %v796
    %v805 = vadd.f32 %v733, %v797
    %v806 = vadd.f32 %v738, %v798
    %v807 = vadd.f32 %v741, %v799
    %v808 = vmax.f32 %v800, 0.0
    %v809 = vmax.f32 %v801, 0.0
    %v810 = vmax.f32 %v802, 0.0
    %v811 = vmax.f32 %v803, 0.0
    %v812 = vmax.f32 %v804, 0.0
    %v813 = vmax.f32 %v805, 0.0
    %v814 = vmax.f32 %v806, 0.0
    %v815 = vmax.f32 %v807, 0.0
    %v816 = vld [vmem:[%s12] sm:$0xf]
    %v817 = vld [vmem:[%s12 + $0x4] sm:$0xf]
    %v818 = vld [vmem:[%s12 + $0x8] sm:$0xf]
    %v819 = vld [vmem:[%s12 + $0xc] sm:$0xf]
    %v820 = vld [vmem:[%s12 + $0x10] sm:$0xf]
    %v821 = vld [vmem:[%s12 + $0x14] sm:$0xf]
    %v822 = vld [vmem:[%s12 + $0x18] sm:$0xf]
    %v823 = vld [vmem:[%s12 + $0x1c] sm:$0xf]
    %v824 = vpack.c.bf16 %v809, %v808
    %v825 = vpack.c.bf16 %v811, %v810
    %v826 = vpack.c.bf16 %v813, %v812
    %v827 = vpack.c.bf16 %v815, %v814
    %v828 = vld [vmem:[%s13] sm:$0xff]
    %v829 = vld [vmem:[%s13 + $0x8] sm:$0xff]
    %v830 = vld [vmem:[%s13 + $0x10] sm:$0xff]
    %v831 = vld [vmem:[%s13 + $0x18] sm:$0xff]
    %v832 = vld [vmem:[%s13 + $0x20] sm:$0xff]
    %v833 = vld [vmem:[%s13 + $0x28] sm:$0xff]
    %v834 = vld [vmem:[%s13 + $0x30] sm:$0xff]
    %v835 = vld [vmem:[%s13 + $0x38] sm:$0xff]
    %837 = vset.pattern.permute.xlu0 0
    %838 = vperm.xlu0 %837, %v828
    %v839 = vpop.permute.xlu0 %838
    %842 = vset.pattern.permute.xlu0 0
    %843 = vperm.xlu0 %842, %v829
    %v844 = vpop.permute.xlu0 %843
    %847 = vset.pattern.permute.xlu0 0
    %848 = vperm.xlu0 %847, %v830
    %v849 = vpop.permute.xlu0 %848
    %852 = vset.pattern.permute.xlu0 0
    %853 = vperm.xlu0 %852, %v831
    %v854 = vpop.permute.xlu0 %853
    %857 = vset.pattern.permute.xlu0 0
    %858 = vperm.xlu0 %857, %v832
    %v859 = vpop.permute.xlu0 %858
    %862 = vset.pattern.permute.xlu0 0
    %863 = vperm.xlu0 %862, %v833
    %v864 = vpop.permute.xlu0 %863
    %867 = vset.pattern.permute.xlu0 0
    %868 = vperm.xlu0 %867, %v834
    %v869 = vpop.permute.xlu0 %868
    %872 = vset.pattern.permute.xlu0 0
    %873 = vperm.xlu0 %872, %v835
    %v874 = vpop.permute.xlu0 %873
    %v884 = vunpack.c.l.b16 %v816
    %v885 = vunpack.c.l.b16 %v817
    %v886 = vunpack.c.l.b16 %v818
    %v887 = vunpack.c.l.b16 %v819
    %v888 = vunpack.c.l.b16 %v820
    %v889 = vunpack.c.l.b16 %v821
    %v890 = vunpack.c.l.b16 %v822
    %v891 = vunpack.c.l.b16 %v823
    %v892 = vpack.c.b16 %v885, %v884
    %v893 = vpack.c.b16 %v887, %v886
    %v894 = vpack.c.b16 %v889, %v888
    %v895 = vpack.c.b16 %v891, %v890
    %v897 = vsel %vm355, %v892, 0
    %v900 = vsel %vm355, %v893, 0
    %v903 = vsel %vm355, %v894, 0
    %v906 = vsel %vm355, %v895, 0
    %908 = vmatprep.subr.bf16.mxu0 0
    %909 = vmatpush1.bf16.msra.mxu0 %v824
    %910 = vmatprep.subr.bf16.mxu0 0
    %911 = vmatpush1.bf16.msra.mxu0 %v825
    %912 = vmatprep.subr.bf16.mxu0 0
    %913 = vmatpush1.bf16.msra.mxu0 %v826
    %914 = vmatprep.subr.bf16.mxu0 0
    %915 = vmatpush1.bf16.msra.mxu0 %v827
    %916 = vmatprep.subr.bf16.mxu0 0
    %917 = vmatpush1.bf16.msra.mxu0 0
    %918 = vmatprep.subr.bf16.mxu0 0
    %919 = vmatpush1.bf16.msra.mxu0 0
    %920 = vmatprep.subr.bf16.mxu0 0
    %921 = vmatpush1.bf16.msra.mxu0 0
    %922 = vmatprep.subr.bf16.mxu0 0
    %923 = vmatpush1.bf16.msra.mxu0 0
    %924 = vmatprep.subr.bf16.mxu0 0
    %925 = vmatpush1.bf16.msra.mxu0 0
    %926 = vmatprep.subr.bf16.mxu0 0
    %927 = vmatpush1.bf16.msra.mxu0 0
    %928 = vmatprep.subr.bf16.mxu0 0
    %929 = vmatpush1.bf16.msra.mxu0 0
    %930 = vmatprep.subr.bf16.mxu0 0
    %931 = vmatpush1.bf16.msra.mxu0 0
    %932 = vmatprep.subr.bf16.mxu0 0
    %933 = vmatpush1.bf16.msra.mxu0 0
    %934 = vmatprep.subr.bf16.mxu0 0
    %935 = vmatpush1.bf16.msra.mxu0 0
    %936 = vmatprep.subr.bf16.mxu0 0
    %937 = vmatpush1.bf16.msra.mxu0 0
    %938 = vmatprep.subr.bf16.mxu0 0
    %939 = vmatpush1.bf16.msra.mxu0 0
    %940 = vmatprep.mubr.bf16.mxu0 0
    %941 = vmatmul.mubr.bf16.gmra.mrb[0].mxu0 %v897
    %v942 = vpop.f32.mrb[0].mxu0
    %v943 = vadd.f32 %v839, %v942
    %v944 = vpop.f32.mrb[0].mxu0
    %v945 = vpop.f32.mrb[0].mxu0
    %v946 = vadd.f32 %v844, %v945
    %v947 = vpop.f32.mrb[0].mxu0
    %948 = vmatprep.mubr.bf16.mxu0 0
    %949 = vmatmul.mubr.bf16.gmra.mrb[0].mxu0 %v900
    %v950 = vpop.f32.mrb[0].mxu0
    %v951 = vadd.f32 %v849, %v950
    %v952 = vpop.f32.mrb[0].mxu0
    %v953 = vpop.f32.mrb[0].mxu0
    %v954 = vadd.f32 %v854, %v953
    %v955 = vpop.f32.mrb[0].mxu0
    %956 = vmatprep.mubr.bf16.mxu0 0
    %957 = vmatmul.mubr.bf16.gmra.mrb[0].mxu0 %v903
    %v958 = vpop.f32.mrb[0].mxu0
    %v959 = vadd.f32 %v859, %v958
    %v960 = vpop.f32.mrb[0].mxu0
    %v961 = vpop.f32.mrb[0].mxu0
    %v962 = vadd.f32 %v864, %v961
    %v963 = vpop.f32.mrb[0].mxu0
    %964 = vmatprep.mubr.bf16.mxu0 0
    %965 = vmatmul.mubr.bf16.gmra.mrb[0].mxu0 %v906
    %v966 = vpop.f32.mrb[0].mxu0
    %v967 = vadd.f32 %v869, %v966
    %v968 = vpop.f32.mrb[0].mxu0
    %v969 = vpop.f32.mrb[0].mxu0
    %v970 = vadd.f32 %v874, %v969
    %v971 = vpop.f32.mrb[0].mxu0
    %972 = vdwg.mxu0
    %v973 = vmax.f32 %v943, 0.0
    %v974 = vmax.f32 %v946, 0.0
    %v975 = vmax.f32 %v951, 0.0
    %v976 = vmax.f32 %v954, 0.0
    %v977 = vmax.f32 %v959, 0.0
    %v978 = vmax.f32 %v962, 0.0
    %v979 = vmax.f32 %v967, 0.0
    %v980 = vmax.f32 %v970, 0.0
    %v981 = vld [vmem:[%s14] sm:$0xf]
    %v982 = vld [vmem:[%s14 + $0x4] sm:$0xf]
    %v983 = vld [vmem:[%s14 + $0x8] sm:$0xf]
    %v984 = vld [vmem:[%s14 + $0xc] sm:$0xf]
    %v985 = vpack.c.bf16 %v974, %v973
    %v986 = vpack.c.bf16 %v976, %v975
    %v987 = vpack.c.bf16 %v978, %v977
    %v988 = vpack.c.bf16 %v980, %v979
    %v989 = vld [vmem:[%s15] sm:$0xff]
    %v990 = vld [vmem:[%s15 + $0x8] sm:$0xff]
    %v991 = vld [vmem:[%s15 + $0x10] sm:$0xff]
    %v992 = vld [vmem:[%s15 + $0x18] sm:$0xff]
    %994 = vset.pattern.permute.xlu0 0
    %995 = vperm.xlu0 %994, %v989
    %v996 = vpop.permute.xlu0 %995
    %999 = vset.pattern.permute.xlu0 0
    %1000 = vperm.xlu0 %999, %v990
    %v1001 = vpop.permute.xlu0 %1000
    %1004 = vset.pattern.permute.xlu0 0
    %1005 = vperm.xlu0 %1004, %v991
    %v1006 = vpop.permute.xlu0 %1005
    %1009 = vset.pattern.permute.xlu0 0
    %1010 = vperm.xlu0 %1009, %v992
    %v1011 = vpop.permute.xlu0 %1010
    %v1017 = vunpack.c.l.b16 %v981
    %v1018 = vunpack.c.l.b16 %v982
    %v1019 = vunpack.c.l.b16 %v983
    %v1020 = vunpack.c.l.b16 %v984
    %v1021 = vpack.c.b16 %v1018, %v1017
    %v1022 = vpack.c.b16 %v1020, %v1019
    %v1024 = vsel %vm355, %v1021, 0
    %v1027 = vsel %vm355, %v1022, 0
    %1029 = vmatprep.subr.bf16.mxu0 0
    %1030 = vmatpush1.bf16.msra.mxu0 %v985
    %1031 = vmatprep.subr.bf16.mxu0 0
    %1032 = vmatpush1.bf16.msra.mxu0 %v986
    %1033 = vmatprep.subr.bf16.mxu0 0
    %1034 = vmatpush1.bf16.msra.mxu0 %v987
    %1035 = vmatprep.subr.bf16.mxu0 0
    %1036 = vmatpush1.bf16.msra.mxu0 %v988
    %1037 = vmatprep.subr.bf16.mxu0 0
    %1038 = vmatpush1.bf16.msra.mxu0 0
    %1039 = vmatprep.subr.bf16.mxu0 0
    %1040 = vmatpush1.bf16.msra.mxu0 0
    %1041 = vmatprep.subr.bf16.mxu0 0
    %1042 = vmatpush1.bf16.msra.mxu0 0
    %1043 = vmatprep.subr.bf16.mxu0 0
    %1044 = vmatpush1.bf16.msra.mxu0 0
    %1045 = vmatprep.subr.bf16.mxu0 0
    %1046 = vmatpush1.bf16.msra.mxu0 0
    %1047 = vmatprep.subr.bf16.mxu0 0
    %1048 = vmatpush1.bf16.msra.mxu0 0
    %1049 = vmatprep.subr.bf16.mxu0 0
    %1050 = vmatpush1.bf16.msra.mxu0 0
    %1051 = vmatprep.subr.bf16.mxu0 0
    %1052 = vmatpush1.bf16.msra.mxu0 0
    %1053 = vmatprep.subr.bf16.mxu0 0
    %1054 = vmatpush1.bf16.msra.mxu0 0
    %1055 = vmatprep.subr.bf16.mxu0 0
    %1056 = vmatpush1.bf16.msra.mxu0 0
    %1057 = vmatprep.subr.bf16.mxu0 0
    %1058 = vmatpush1.bf16.msra.mxu0 0
    %1059 = vmatprep.subr.bf16.mxu0 0
    %1060 = vmatpush1.bf16.msra.mxu0 0
    %1061 = vmatprep.mubr.bf16.mxu0 0
    %1062 = vmatmul.mubr.bf16.gmra.mrb[0].mxu0 %v1024
    %v1063 = vpop.f32.mrb[0].mxu0
    %v1064 = vadd.f32 %v996, %v1063
    %v1065 = vpop.f32.mrb[0].mxu0
    %v1066 = vpop.f32.mrb[0].mxu0
    %v1067 = vadd.f32 %v1001, %v1066
    %v1068 = vpop.f32.mrb[0].mxu0
    %1069 = vmatprep.mubr.bf16.mxu0 0
    %1070 = vmatmul.mubr.bf16.gmra.mrb[0].mxu0 %v1027
    %v1071 = vpop.f32.mrb[0].mxu0
    %v1072 = vadd.f32 %v1006, %v1071
    %v1073 = vpop.f32.mrb[0].mxu0
    %v1074 = vpop.f32.mrb[0].mxu0
    %v1075 = vadd.f32 %v1011, %v1074
    %v1076 = vpop.f32.mrb[0].mxu0
    %1077 = vdwg.mxu0
    %v1078 = vmax.f32 %v1064, 0.0
    %v1079 = vmax.f32 %v1067, 0.0
    %v1080 = vmax.f32 %v1072, 0.0
    %v1081 = vmax.f32 %v1075, 0.0
    %v1082 = vld [vmem:[%s16] sm:$0xff]
    %v1083 = vld [vmem:[%s16 + $0x8] sm:$0xff]
    %v1084 = vld [vmem:[%s16 + $0x10] sm:$0xff]
    %v1085 = vld [vmem:[%s16 + $0x18] sm:$0xff]
    %1087 = vset.pattern.permute.xlu0 0
    %1088 = vperm.xlu0 %1087, %v1082
    %v1089 = vpop.permute.xlu0 %1088
    %1092 = vset.pattern.permute.xlu0 0
    %1093 = vperm.xlu0 %1092, %v1083
    %v1094 = vpop.permute.xlu0 %1093
    %1097 = vset.pattern.permute.xlu0 0
    %1098 = vperm.xlu0 %1097, %v1084
    %v1099 = vpop.permute.xlu0 %1098
    %1102 = vset.pattern.permute.xlu0 0
    %1103 = vperm.xlu0 %1102, %v1085
    %v1104 = vpop.permute.xlu0 %1103
    %v1106 = vmul.f32 %v1078, %v1089
    %v1107 = vmul.f32 %v1079, %v1094
    %v1108 = vmul.f32 %v1080, %v1099
    %v1109 = vmul.f32 %v1081, %v1104
    %v1110 = vadd.f32 %v1106, %v1107
    %v1111 = vadd.f32 %v1110, %v1108
    %v1112 = vadd.f32 %v1111, %v1109
    %v1113 = vrot.slane %v1112, 4
    %v1114 = vadd.f32 %v1112, %v1113
    %v1115 = vrot.slane %v1114, 2
    %v1116 = vadd.f32 %v1114, %v1115
    %v1117 = vrot.slane %v1116, 1
    %v1118 = vadd.f32 %v1116, %v1117
    %v1119 = vld [vmem:[#allocation3] sm:$0x1]
    %1121 = vset.pattern.permute.xlu0 0
    %1122 = vperm.xlu0 %1121, %v1119
    %v1123 = vpop.permute.xlu0 %1122
    %v1125 = vlaneseq
    %v1126 = vshrl.u32 %v1125, 7
    %v1127 = vsub.s32 0, %v1126
    %v1128 = vrot.slane %v1123, %v1127
    %v1129 = vadd.f32 %v1118, %v1128
    %1130 = vst [vmem:[#allocation4 + $0x1] sm:$0x1] %v1129
    // Predicated region
    $region74: #{tpu_custom_call.1} parent=1 // pred_check
      _
    $region75: #{tpu_custom_call.1} parent=1 // pred_check_branch
      %1132 = sbr.rel (0) target = $region77
    $region76: #{tpu_custom_call.1} parent=1 // pred_region
      %s1134 = ssub.s32 32, 32
      %1135 = vsyncadd [#allocation5], %s1134
      %s1137 = sshll.u32 [#allocation4], 4
      %s1138 = int_to_ptr.vmem [resolvable:$true] %s1137
      %1140 = dma.vmem_to_hbm [thread:$0]  %s1138, 32, %s18, [#allocation5]
    $region77: #{tpu_custom_call.1} parent=1 // pred_fallthru
      _
    // Predicated region
    $region78: #{tpu_custom_call.1} parent=1 // pred_check
      _
    $region79: #{tpu_custom_call.1} parent=1 // pred_check_branch
      %1142 = sbr.rel (0) target = $region81
    $region80: #{tpu_custom_call.1} parent=1 // pred_region
      %1143 = dma.done [#allocation5], 32
    $region81: #{tpu_custom_call.1} parent=1 // pred_fallthru
      _
    %1144 = vsyncpa [#allocation5], 1

</llo_original>
